<compile_context>
chip_gen: v7x
topology: tpu7x:2x2x1
jax: 0.10.0
libtpu: 0.0.40
codegen_flags: <defaults>
</compile_context>

<pallas_src>
import functools

import jax
import jax.numpy as jnp
from jax.experimental import pallas as pl
from jax.experimental.pallas import tpu as pltpu


_NEG_INF_ADD = -10000.0


def _entropy_kernel(*refs, masked, total_rows, block_rows, steps_per_core,
                    needs_row_mask):
    """One grid step: per-row entropy of a (TR, V) tile of logits, accumulated
    into this grid-slice's resident (TR, 1) partial-sum output block."""
    if masked:
        scores_ref, mask_ref, out_ref = refs
    else:
        scores_ref, out_ref = refs
        mask_ref = None

    i = pl.program_id(1)                      # reduction ("arbitrary") axis

    @pl.when(i == 0)
    def _init():
        out_ref[...] = jnp.zeros_like(out_ref)

    z = scores_ref[...].astype(jnp.float32)   # cast in-kernel; DMA native dtype
    if masked:
        m = mask_ref[...].astype(jnp.float32)
        z = z + (1.0 - m) * jnp.float32(_NEG_INF_ADD)

    # Single-exp, numerically-stable entropy along the last (lane) axis:
    #   H = logsumexp(z) - E_p[z] = (log S + zmax) - sum(e*z)/S,  e = exp(z-zmax)
    zmax = jnp.max(z, axis=-1, keepdims=True)
    e = jnp.exp(z - zmax)
    s = jnp.sum(e, axis=-1, keepdims=True)
    ez = jnp.sum(e * z, axis=-1, keepdims=True)
    ent = jnp.log(s) + zmax - ez / s          # (TR, 1) per-row entropies

    if needs_row_mask:
        c = pl.program_id(0)
        row0 = (c * steps_per_core + i) * block_rows
        row = row0 + jax.lax.broadcasted_iota(jnp.int32, (block_rows, 1), 0)
        ent = jnp.where(row < total_rows, ent, 0.0)

    out_ref[...] += ent


def _round_up(x, m):
    return ((x + m - 1) // m) * m


def entropy_loss(scores, attention_mask=None, mode="max", reduction="mean",
                 *, core_split=2, target_block_bytes=1 << 20):
    """Pallas implementation of EntropyLoss.forward (mode/reduction as in torch)."""
    if reduction != "mean":
        # TODO(synk): reduction != 'mean' (per-row entropy output) not implemented.
        raise NotImplementedError("only reduction='mean' is implemented")

    scores = jnp.asarray(scores)
    # torch applies the additive mask only when scores.dim() > 1
    masked = (attention_mask is not None) and (scores.ndim > 1)
    if scores.ndim == 1:
        scores = scores[None, :]

    V = scores.shape[-1]
    scores2d = scores.reshape(-1, V)
    R = scores2d.shape[0]
    mask2d = jnp.asarray(attention_mask).reshape(-1, V) if masked else None

    # ---- tiling: TR rows per grid step, rows split across `core_split` slices.
    # Budget ~target_block_bytes per input block at native dtype; with default
    # double buffering and <=2 inputs this stays well under every chip's scoped
    # VMEM default, so no vmem_limit_bytes override is needed.
    # TODO(synk): vocab-scale V (>=8K) would want a V-tiled online-softmax variant.
    P = max(1, int(core_split))
    itemsize = jnp.dtype(scores2d.dtype).itemsize
    tr_cap = max(8, (target_block_bytes // (V * itemsize)) // 8 * 8)
    rows_per_core = -(-R // P)
    TR = int(max(8, min(tr_cap, _round_up(rows_per_core, 8))))
    steps = int(-(-rows_per_core // TR))
    R_pad = P * steps * TR

    if R_pad != R:
        scores2d = jnp.pad(scores2d, ((0, R_pad - R), (0, 0)))
        if masked:
            mask2d = jnp.pad(mask2d, ((0, R_pad - R), (0, 0)), constant_values=1)

    kernel = functools.partial(
        _entropy_kernel,
        masked=masked,
        total_rows=R,
        block_rows=TR,
        steps_per_core=steps,
        needs_row_mask=(R_pad != R),
    )

    tile_spec = pl.BlockSpec((TR, V), lambda c, i: (c * steps + i, 0))
    in_specs = [tile_spec, tile_spec] if masked else [tile_spec]
    operands = (scores2d, mask2d) if masked else (scores2d,)

    partials = pl.pallas_call(
        kernel,
        out_shape=jax.ShapeDtypeStruct((P * TR, 1), jnp.float32),
        grid_spec=pltpu.PrefetchScalarGridSpec(
            num_scalar_prefetch=0,
            grid=(P, steps),
            in_specs=in_specs,
            # Output block depends only on the parallel slice -> it stays
            # resident in VMEM across the reduction axis (accumulator pattern),
            # and each parallel slice owns its own partial (race-free on v7x).
            out_specs=pl.BlockSpec((TR, 1), lambda c, i: (c, 0)),
        ),
        compiler_params=pltpu.CompilerParams(
            dimension_semantics=("parallel", "arbitrary"),
        ),
    )(*operands)

    sign = -1.0 if mode == "max" else 1.0
    return (jnp.float32(sign) / jnp.float32(R)) * jnp.sum(partials)


def _entropy_loss_ref(scores, attention_mask=None, mode="max"):
    """Pure-JAX reference (mirrors the torch module)."""
    scores = jnp.asarray(scores)
    if attention_mask is None:
        attention_mask = jnp.ones_like(scores)
    if scores.ndim > 1:
        scores = scores + (1.0 - attention_mask) * -10000.0
    logp = jax.nn.log_softmax(scores, axis=-1)
    ent = -jnp.sum(jnp.exp(logp) * logp, axis=-1)
    if mode == "max":
        ent = -ent
    return jnp.mean(ent)


if __name__ == "__main__":
    key = jax.random.PRNGKey(0)
    k1, k2, k3 = jax.random.split(key, 3)

    # (batch, seq, num_categories) — small shapes consistent with the module.
    B, N, V = 2, 8, 128
    scores = jax.random.normal(k1, (B, N, V), dtype=jnp.float32)
    # Partially-masked attention mask (1 = keep, 0 = masked out).
    attention_mask = (jax.random.uniform(k2, (B, N, V)) > 0.2).astype(jnp.float32)

    # 1) masked, mode='max'
    loss_m = jax.block_until_ready(
        entropy_loss(scores, attention_mask=attention_mask, mode="max"))
    ref_m = _entropy_loss_ref(scores, attention_mask, mode="max")
    assert jnp.allclose(loss_m, ref_m, atol=1e-4, rtol=1e-4), (loss_m, ref_m)

    # 2) unmasked (exercises the no-mask kernel variant), mode='min'
    loss_u = jax.block_until_ready(entropy_loss(scores, mode="min"))
    ref_u = _entropy_loss_ref(scores, None, mode="min")
    assert jnp.allclose(loss_u, ref_u, atol=1e-4, rtol=1e-4), (loss_u, ref_u)

    # 3) row count not a multiple of the tile (exercises padding + row masking)
    scores_odd = jax.random.normal(k3, (3, 5, V), dtype=jnp.float32)
    loss_o = jax.block_until_ready(entropy_loss(scores_odd, mode="max"))
    ref_o = _entropy_loss_ref(scores_odd, None, mode="max")
    assert jnp.allclose(loss_o, ref_o, atol=1e-4, rtol=1e-4), (loss_o, ref_o)

    print("KERNEL_OK")
</pallas_src>

<mosaic_0001>
module attributes {stable_mosaic.version = 11 : i64} {
  func.func @_entropy_kernel(%arg0: i32, %arg1: i32, %arg2: memref<8x128xf32, #tpu.memory_space<vmem>>, %arg3: memref<8x128xf32, #tpu.memory_space<vmem>>, %arg4: memref<8x1xf32, #tpu.memory_space<vmem>>) attributes {dimension_semantics = [#tpu.dimension_semantics<parallel>, #tpu.dimension_semantics<arbitrary>], iteration_bounds = array<i64: 2, 1>, scalar_prefetch = 0 : i64, scratch_operands = 0 : i64, tpu.core_type = #tpu.core_type<tc>, window_params = [{transform_indices = @transform_0, window_bounds = array<i64: 8, 128>}, {transform_indices = @transform_1, window_bounds = array<i64: 8, 128>}, {transform_indices = @transform_2, window_bounds = array<i64: 8, 1>}]} {
    %c0_i32 = arith.constant 0 : i32
    %0 = arith.cmpi eq, %arg1, %c0_i32 : i32
    %1 = arith.extui %0 : i1 to i32
    %c0_i32_0 = arith.constant 0 : i32
    %2 = arith.cmpi ne, %1, %c0_i32_0 : i32
    scf.if %2 {
      %cst_12 = arith.constant 0.000000e+00 : f32
      %27 = vector.broadcast %cst_12 : f32 to vector<8x1xf32>
      %c0_13 = arith.constant 0 : index
      %c0_14 = arith.constant 0 : index
      %28 = vector.load %arg4[%c0_13, %c0_14] : memref<8x1xf32, #tpu.memory_space<vmem>>, vector<8x1xf32>
      tpu.vector_store %arg4[%c0_13, %c0_14], %27 {strides = array<i32>} : memref<8x1xf32, #tpu.memory_space<vmem>>, vector<8x1xf32>,
    } else {
    }
    %c0 = arith.constant 0 : index
    %c0_1 = arith.constant 0 : index
    %3 = vector.load %arg2[%c0, %c0_1] : memref<8x128xf32, #tpu.memory_space<vmem>>, vector<8x128xf32>
    %c0_2 = arith.constant 0 : index
    %c0_3 = arith.constant 0 : index
    %4 = vector.load %arg3[%c0_2, %c0_3] : memref<8x128xf32, #tpu.memory_space<vmem>>, vector<8x128xf32>
    %cst = arith.constant 1.000000e+00 : f32
    %5 = vector.broadcast %cst : f32 to vector<8x128xf32>
    %6 = arith.subf %5, %4 : vector<8x128xf32>
    %cst_4 = arith.constant -1.000000e+04 : f32
    %7 = vector.broadcast %cst_4 : f32 to vector<8x128xf32>
    %8 = arith.mulf %6, %7 : vector<8x128xf32>
    %9 = arith.addf %3, %8 : vector<8x128xf32>
    %cst_5 = arith.constant dense<0xFF800000> : vector<8xf32>
    %10 = vector.multi_reduction <maximumf>, %9, %cst_5 [1] : vector<8x128xf32> to vector<8xf32>
    %11 = vector.shape_cast %10 : vector<8xf32> to vector<8x1xf32>
    %12 = vector.broadcast %11 : vector<8x1xf32> to vector<8x128xf32>
    %13 = arith.subf %9, %12 : vector<8x128xf32>
    %14 = math.exp %13 : vector<8x128xf32>
    %cst_6 = arith.constant dense<0.000000e+00> : vector<8xf32>
    %15 = vector.multi_reduction <add>, %14, %cst_6 [1] : vector<8x128xf32> to vector<8xf32>
    %16 = vector.shape_cast %15 : vector<8xf32> to vector<8x1xf32>
    %17 = arith.mulf %14, %9 : vector<8x128xf32>
    %cst_7 = arith.constant dense<0.000000e+00> : vector<8xf32>
    %18 = vector.multi_reduction <add>, %17, %cst_7 [1] : vector<8x128xf32> to vector<8xf32>
    %19 = vector.shape_cast %18 : vector<8xf32> to vector<8x1xf32>
    %20 = math.log %16 : vector<8x1xf32>
    %21 = arith.addf %20, %11 : vector<8x1xf32>
    %22 = arith.divf %19, %16 : vector<8x1xf32>
    %23 = arith.subf %21, %22 : vector<8x1xf32>
    %c0_8 = arith.constant 0 : index
    %c0_9 = arith.constant 0 : index
    %24 = vector.load %arg4[%c0_8, %c0_9] : memref<8x1xf32, #tpu.memory_space<vmem>>, vector<8x1xf32>
    %25 = arith.addf %24, %23 : vector<8x1xf32>
    %c0_10 = arith.constant 0 : index
    %c0_11 = arith.constant 0 : index
    %26 = vector.load %arg4[%c0_10, %c0_11] : memref<8x1xf32, #tpu.memory_space<vmem>>, vector<8x1xf32>
    tpu.vector_store %arg4[%c0_10, %c0_11], %25 {strides = array<i32>} : memref<8x1xf32, #tpu.memory_space<vmem>>, vector<8x1xf32>,
    return
  }
  func.func @transform_0(%arg0: i32, %arg1: i32) -> (i32, i32) {
    %c1_i32 = arith.constant 1 : i32
    %0 = arith.muli %arg0, %c1_i32 : i32
    %1 = arith.addi %0, %arg1 : i32
    %c0_i32 = arith.constant 0 : i32
    %c0_i32_0 = arith.constant 0 : i32
    return %1, %c0_i32 : i32, i32
  }
  func.func @transform_1(%arg0: i32, %arg1: i32) -> (i32, i32) {
    %c1_i32 = arith.constant 1 : i32
    %0 = arith.muli %arg0, %c1_i32 : i32
    %1 = arith.addi %0, %arg1 : i32
    %c0_i32 = arith.constant 0 : i32
    %c0_i32_0 = arith.constant 0 : i32
    return %1, %c0_i32 : i32, i32
  }
  func.func @transform_2(%arg0: i32, %arg1: i32) -> (i32, i32) {
    %c0_i32 = arith.constant 0 : i32
    %c0_i32_0 = arith.constant 0 : i32
    return %arg0, %c0_i32 : i32, i32
  }
}

</mosaic_0001>

<llo_original>
// kernel: tpu_custom_call.1
$region0: #{tpu_custom_call.1}
  #allocation0 [shape = 'u32[]', space=smem, size = 0x4, offset = 0x4, fixed_abs, tag = 'smem constant byte address 0x4 - core index']
  #allocation1 [shape = 'u32[144,128]{1,0:T(1,128)}', space=vmem, size = 0x12000, scoped, tag = 'internal scratch']
  %s0 = inlined_call_operand.hbm [shape: f32[16,128], index: 0, kind: input, shape index: {}]
  %s1 = inlined_call_operand.hbm [shape: f32[16,128], index: 1, kind: input, shape index: {}]
  %s2 = inlined_call_operand.vmem [shape: f32[16,1], index: 2, kind: output, shape index: {}]
  %s3 = sld [smem:[#allocation0]]
  $region53: #{tpu_custom_call.1} parent=0
    _
  %s5 = ssub.s32 1, %s3
  %s6 = scalar_select 0, %s5, %s3
  $region1: #{tpu_custom_call.1} parent=0
    #allocation2 [shape = 'u8[8192]{0}', space=vmem, size = 0x2000, scoped, tag = 'input window, operand 0']
    #allocation3 [shape = 's32[2]{0}', space=sflag, size = 0x8, scoped, tag = 'scoped memory for tpu_custom_call.1']
    #allocation4 [shape = 'u8[8192]{0}', space=vmem, size = 0x2000, scoped, tag = 'input window, operand 1']
    #allocation5 [shape = 's32[2]{0}', space=sflag, size = 0x8, scoped, tag = 'scoped memory for tpu_custom_call.1']
    %7 = vsyncpa [#allocation3], 0
    %s8 = scalar_lea.sflag [#allocation3], 1
    %9 = vsyncpa %s8, 0
    %10 = vsyncpa [#allocation5], 0
    %s11 = scalar_lea.sflag [#allocation5], 1
    %12 = vsyncpa %s11, 0
    loop: start=0, step=1, limit=4
    $region2: #{tpu_custom_call.1} parent=1 // loop_pre_header
      _
    $region3: #{tpu_custom_call.1} parent=1 // loop_header
      %s14 = sphi 0, %s18
      %p15 = scmp.ge.s32.totalorder %s14, 4
      %s21 = sphi 0, %s33
      %s22 = sphi 0, %s29
      %s23 = sphi 0, %s21
      %s24 = sphi 0, %s22
      %s25 = sphi 0, %s23
      %s26 = sphi 0, %s24
      %s38 = sphi 0, %s40
      %s41 = sphi 0, %s38
      %s42 = sphi 0, %s41
      %s58 = sphi 0, %s42
      %s66 = sphi 0, %s68
      %s69 = sphi 0, %s66
      %s70 = sphi 0, %s69
      %s86 = sphi 0, %s70
      %s92 = sphi 0, %s94
      %s95 = sphi 0, %s92
      %s96 = sphi 0, %s95
      %s112 = sphi 0, %s96
    $region4: #{tpu_custom_call.1} parent=1 // loop_header_branch
      %17 = sbr.rel (%p15) target = $region8
    $region5: #{tpu_custom_call.1} parent=1 // loop_body
      %s19 = ssub.s32 %s14, 1
      %s20 = ssub.s32 %s14, 2
      %s27 = sadd.s32 1, %s22
      %p28 = scmp.ge.s32.totalorder %s27, 1
      %s29 = scalar_select %p28, 0, %s27
      %s30 = sadd.s32 1, %s21
      %s31 = scalar_select %p28, %s30, %s21
      %p32 = scmp.ge.s32.totalorder %s31, 2
      %s33 = scalar_select %p32, 0, %s31
      %s34 = sadd.s32 %s21, %s22
      %s35 = sadd.s32 %s33, %s29
      %s36 = ssub.s32 %s34, %s35
      %p37 = scmp.eq.s32.totalorder %s36, 0
      %s39 = sadd.s32 %s38, 1
      %s40 = scalar_select %p37, %s38, %s39
      %p43 = pneg %p37
      %p44 = scmp.eq.s32.totalorder %s14, 1
      %p45 = por %p43, %p44
      %p46 = scmp.ne.s32.totalorder %s38, %s41
      %p47 = scmp.eq.s32.totalorder %s14, 0
      %p48 = por %p46, %p47
      %p49 = scmp.ne.s32.totalorder %s38, %s41
      %p50 = scmp.eq.s32.totalorder %s19, 1
      %p51 = por %p49, %p50
      %p52 = scmp.ne.s32.totalorder %s41, %s42
      %p53 = scmp.eq.s32.totalorder %s19, 0
      %p54 = por %p52, %p53
      %p55 = scmp.ne.s32.totalorder %s41, %s42
      %p56 = scmp.eq.s32.totalorder %s20, 1
      %p57 = por %p55, %p56
      %p59 = scmp.ne.s32.totalorder %s42, %s58
      %p60 = scmp.eq.s32.totalorder %s20, 0
      %p61 = por %p59, %p60
      %s62 = sadd.s32 %s21, %s22
      %s63 = sadd.s32 %s33, %s29
      %s64 = ssub.s32 %s62, %s63
      %p65 = scmp.eq.s32.totalorder %s64, 0
      %s67 = sadd.s32 %s66, 1
      %s68 = scalar_select %p65, %s66, %s67
      %p71 = pneg %p65
      %p72 = scmp.eq.s32.totalorder %s14, 1
      %p73 = por %p71, %p72
      %p74 = scmp.ne.s32.totalorder %s66, %s69
      %p75 = scmp.eq.s32.totalorder %s14, 0
      %p76 = por %p74, %p75
      %p77 = scmp.ne.s32.totalorder %s66, %s69
      %p78 = scmp.eq.s32.totalorder %s19, 1
      %p79 = por %p77, %p78
      %p80 = scmp.ne.s32.totalorder %s69, %s70
      %p81 = scmp.eq.s32.totalorder %s19, 0
      %p82 = por %p80, %p81
      %p83 = scmp.ne.s32.totalorder %s69, %s70
      %p84 = scmp.eq.s32.totalorder %s20, 1
      %p85 = por %p83, %p84
      %p87 = scmp.ne.s32.totalorder %s70, %s86
      %p88 = scmp.eq.s32.totalorder %s20, 0
      %p89 = por %p87, %p88
      %s90 = ssub.s32 %s21, %s33
      %p91 = scmp.eq.s32.totalorder %s90, 0
      %s93 = sadd.s32 %s92, 1
      %s94 = scalar_select %p91, %s92, %s93
      %p97 = pneg %p91
      %p98 = scmp.eq.s32.totalorder %s14, 1
      %p99 = por %p97, %p98
      %p100 = scmp.ne.s32.totalorder %s92, %s95
      %p101 = scmp.eq.s32.totalorder %s14, 0
      %p102 = por %p100, %p101
      %p103 = scmp.ne.s32.totalorder %s92, %s95
      %p104 = scmp.eq.s32.totalorder %s19, 1
      %p105 = por %p103, %p104
      %p106 = scmp.ne.s32.totalorder %s95, %s96
      %p107 = scmp.eq.s32.totalorder %s19, 0
      %p108 = por %p106, %p107
      %p109 = scmp.ne.s32.totalorder %s95, %s96
      %p110 = scmp.eq.s32.totalorder %s20, 1
      %p111 = por %p109, %p110
      %p113 = scmp.ne.s32.totalorder %s96, %s112
      %p114 = scmp.eq.s32.totalorder %s20, 0
      %p115 = por %p113, %p114
      %p116 = scmp.le.s32.totalorder 1, %s14
      %p117 = scmp.lt.s32.totalorder %s14, 3
      %p118 = pnand %p116, %p117
      %p119 = pneg %p118
      // Predicated region
      $region9: #{tpu_custom_call.1} parent=5 // pred_check
        _
      $region10: #{tpu_custom_call.1} parent=5 // pred_check_branch
        %121 = sbr.rel (%p118) target = $region12
      $region11: #{tpu_custom_call.1} parent=5 // pred_region
        %s122 = ssub.s32 %s14, 1
      $region12: #{tpu_custom_call.1} parent=5 // pred_fallthru
        _
      %p123 = scmp.lt.s32.totalorder %s14, 2
      // Predicated region
      $region13: #{tpu_custom_call.1} parent=5 // pred_check
        %p124 = pneg %p123
      $region14: #{tpu_custom_call.1} parent=5 // pred_check_branch
        %126 = sbr.rel (%p124) target = $region16
      $region15: #{tpu_custom_call.1} parent=5 // pred_region
        // Predicated region
        $region17: #{tpu_custom_call.1} parent=15 // pred_check
          %p127 = pneg %p48
        $region18: #{tpu_custom_call.1} parent=15 // pred_check_branch
          %129 = sbr.rel (%p127) target = $region20
        $region19: #{tpu_custom_call.1} parent=15 // pred_region
          %s130 = sand.u32 %s38, 1
          %s131 = scalar_lea.sflag [#allocation3], %s130
          %s132 = sand.u32 %s38, 1
          %s133 = smul.addr %s132, 8
          %s134 = scalar_lea.vmem [#allocation2], %s133
          %s135 = sadd.s32 %s21, %s22
          %s137 = ssub.s32 128, 128
          %138 = vsyncadd %s131, %s137
          %s139 = smul.addr %s135, 128
          %s140 = scalar_lea.hbm %s0, %s139
          %s142 = sshll.u32 %s134, 4
          %s143 = int_to_ptr.vmem [resolvable:$true] %s142
          %145 = dma.hbm_to_vmem [thread:$0]  %s140, 128, %s143, %s131
        $region20: #{tpu_custom_call.1} parent=15 // pred_fallthru
          _
        // Predicated region
        $region21: #{tpu_custom_call.1} parent=15 // pred_check
          %p146 = pneg %p76
        $region22: #{tpu_custom_call.1} parent=15 // pred_check_branch
          %148 = sbr.rel (%p146) target = $region24
        $region23: #{tpu_custom_call.1} parent=15 // pred_region
          %s149 = sand.u32 %s66, 1
          %s150 = scalar_lea.sflag [#allocation5], %s149
          %s151 = sand.u32 %s66, 1
          %s152 = smul.addr %s151, 8
          %s153 = scalar_lea.vmem [#allocation4], %s152
          %s154 = sadd.s32 %s21, %s22
          %s156 = ssub.s32 128, 128
          %157 = vsyncadd %s150, %s156
          %s158 = smul.addr %s154, 128
          %s159 = scalar_lea.hbm %s1, %s158
          %s161 = sshll.u32 %s153, 4
          %s162 = int_to_ptr.vmem [resolvable:$true] %s161
          %164 = dma.hbm_to_vmem [thread:$0]  %s159, 128, %s162, %s150
        $region24: #{tpu_custom_call.1} parent=15 // pred_fallthru
          _
      $region16: #{tpu_custom_call.1} parent=5 // pred_fallthru
        _
      %p165 = scmp.le.s32.totalorder 1, %s14
      %p166 = scmp.lt.s32.totalorder %s14, 3
      %p167 = pnand %p165, %p166
      %p168 = pneg %p167
      // Predicated region
      $region25: #{tpu_custom_call.1} parent=5 // pred_check
        _
      $region26: #{tpu_custom_call.1} parent=5 // pred_check_branch
        %170 = sbr.rel (%p167) target = $region28
      $region27: #{tpu_custom_call.1} parent=5 // pred_region
        %s171 = ssub.s32 %s14, 1
        %s172 = sand.u32 %s41, 1
        %s173 = scalar_lea.sflag [#allocation3], %s172
        %s174 = sand.u32 %s41, 1
        %s175 = smul.addr %s174, 8
        %s176 = scalar_lea.vmem [#allocation2], %s175
        // Predicated region
        $region29: #{tpu_custom_call.1} parent=27 // pred_check
          %p177 = pneg %p54
        $region30: #{tpu_custom_call.1} parent=27 // pred_check_branch
          %179 = sbr.rel (%p177) target = $region32
        $region31: #{tpu_custom_call.1} parent=27 // pred_region
          %180 = dma.done %s173, 128
        $region32: #{tpu_custom_call.1} parent=27 // pred_fallthru
          _
        %s181 = sand.u32 %s69, 1
        %s182 = scalar_lea.sflag [#allocation5], %s181
        %s183 = sand.u32 %s69, 1
        %s184 = smul.addr %s183, 8
        %s185 = scalar_lea.vmem [#allocation4], %s184
        // Predicated region
        $region33: #{tpu_custom_call.1} parent=27 // pred_check
          %p186 = pneg %p82
        $region34: #{tpu_custom_call.1} parent=27 // pred_check_branch
          %188 = sbr.rel (%p186) target = $region36
        $region35: #{tpu_custom_call.1} parent=27 // pred_region
          %189 = dma.done %s182, 128
        $region36: #{tpu_custom_call.1} parent=27 // pred_fallthru
          _
        %s190 = sand.u32 %s41, 1
        %s191 = scalar_lea.sflag [#allocation3], %s190
        %s192 = sand.u32 %s41, 1
        %s193 = smul.addr %s192, 8
        %s194 = scalar_lea.vmem [#allocation2], %s193
        %p195 = pneg %p54
        %p196 = pneg %p51
        %s197 = sand.u32 %s69, 1
        %s198 = scalar_lea.sflag [#allocation5], %s197
        %s199 = sand.u32 %s69, 1
        %s200 = smul.addr %s199, 8
        %s201 = scalar_lea.vmem [#allocation4], %s200
        %p202 = pneg %p82
        %p203 = pneg %p79
        %p204 = pneg %p108
        %p205 = pneg %p105
        %p206 = scmp.lt.s32.totalorder %s23, 1
        %s207 = scalar_select %p206, %s23, 1
        %s208 = smul.addr %s207, 8
        %s209 = scalar_lea.vmem %s2, %s208
        %s210 = sadd.s32 %s23, %s24
        %s211 = sadd.s32 %s23, %s24
        %p212 = scmp.lt.s32.totalorder %s23, 1
        %s213 = scalar_select %p212, %s23, 1
        %s214 = smul.addr %s213, 8
        %s215 = scalar_lea.vmem %s2, %s214
        %p216 = scmp.eq.s32.totalorder %s24, 0
        // Predicated region
        $region37: #{tpu_custom_call.1} parent=27 // pred_check
          %p217 = pneg %p216
        $region38: #{tpu_custom_call.1} parent=27 // pred_check_branch
          %219 = sbr.rel (%p217) target = $region40
        $region39: #{tpu_custom_call.1} parent=27 // pred_region
          %vm220 = vcmask 7168
          %221 = vst.msk [vmem:[%s215] sm:$0xff] %vm220, 0.0
        $region40: #{tpu_custom_call.1} parent=27 // pred_fallthru
          _
        %v222 = vld [vmem:[%s176] sm:$0xff]
        %v223 = vld [vmem:[%s185] sm:$0xff]
        %v224 = vsub.f32 1.0, %v223
        %v225 = vmul.f32 %v224, -10000.0
        %v226 = vadd.f32 %v222, %v225
        %227 = vmax.xlane.f32.xlu0 %v226
        %v228 = vpop.xlane.xlu0 %227
        %v229 = vsub.f32 %v226, %v228
        %v230 = vmul.f32 %v229, 1.442695
        %v231 = vpow.pop %v230
        %232 = vadd.xlane.f32.xlu0 %v231
        %v233 = vpop.xlane.xlu0 %232
        %v234 = vmul.f32 %v231, %v226
        %235 = vadd.xlane.f32.xlu0 %v234
        %v236 = vpop.xlane.xlu0 %235
        %v237 = vlog2.pop %v233
        %v238 = vmul.f32 %v237, 0.6931472
        %v239 = vadd.f32 %v238, %v228
        %v240 = vrcp.pop %v233
        %v241 = vmul.f32 %v236, %v240
        %v242 = vsub.f32 %v239, %v241
        %v243 = vld [vmem:[%s215] sm:$0xff]
        %v244 = vadd.f32 %v243, %v242
        %vm245 = vcmask 7168
        %246 = vst.msk [vmem:[%s215] sm:$0xff] %vm245, %v244
        %p247 = scmp.lt.s32.totalorder %s23, 1
        %s248 = scalar_select %p247, %s23, 1
        %s249 = smul.addr %s248, 8
        %s250 = scalar_lea.vmem %s2, %s249
        // Predicated region
        $region41: #{tpu_custom_call.1} parent=27 // pred_check
          %p251 = pneg %p105
        $region42: #{tpu_custom_call.1} parent=27 // pred_check_branch
          %253 = sbr.rel (%p251) target = $region44
        $region43: #{tpu_custom_call.1} parent=27 // pred_region
          _
        $region44: #{tpu_custom_call.1} parent=27 // pred_fallthru
          _
      $region28: #{tpu_custom_call.1} parent=5 // pred_fallthru
        _
      %p254 = scmp.le.s32.totalorder 2, %s14
      // Predicated region
      $region45: #{tpu_custom_call.1} parent=5 // pred_check
        %p255 = pneg %p254
      $region46: #{tpu_custom_call.1} parent=5 // pred_check_branch
        %257 = sbr.rel (%p255) target = $region48
      $region47: #{tpu_custom_call.1} parent=5 // pred_region
        %s258 = ssub.s32 %s14, 2
        // Predicated region
        $region49: #{tpu_custom_call.1} parent=47 // pred_check
          %p259 = pneg %p111
        $region50: #{tpu_custom_call.1} parent=47 // pred_check_branch
          %261 = sbr.rel (%p259) target = $region52
        $region51: #{tpu_custom_call.1} parent=47 // pred_region
          %p262 = scmp.lt.s32.totalorder %s25, 1
          %s263 = scalar_select %p262, %s25, 1
          %s264 = smul.addr %s263, 8
          %s265 = scalar_lea.vmem %s2, %s264
        $region52: #{tpu_custom_call.1} parent=47 // pred_fallthru
          _
      $region48: #{tpu_custom_call.1} parent=5 // pred_fallthru
        _
    $region6: #{tpu_custom_call.1} parent=1 // loop_footer
      %s18 = sadd.s32 1, %s14
    $region7: #{tpu_custom_call.1} parent=1 // loop_footer_branch
      %13 = sbr.rel target = $region3
    $region8: #{tpu_custom_call.1} parent=1 // loop_exit
      _
    %266 = vsyncpa [#allocation3], 1
    %s267 = scalar_lea.sflag [#allocation3], 1
    %268 = vsyncpa %s267, 1
    %269 = vsyncpa [#allocation5], 1
    %s270 = scalar_lea.sflag [#allocation5], 1
    %271 = vsyncpa %s270, 1

</llo_original>
